<compile_context>
chip_gen: v5e
topology: v5e:2x2
jax: 0.10.0
libtpu: 0.0.40
codegen_flags: <defaults>
</compile_context>

<pallas_src>
import functools

import numpy as np

import jax
import jax.numpy as jnp
from jax import lax
from jax.experimental import pallas as pl
from jax.experimental.pallas import tpu as pltpu


# ------------------------------ Pallas kernel --------------------------------

def _shifted_masked_tap(y, d, mask_row, Ce, HoW):
    """tap[ce, j] = y_Wpadded[ce, j + d]  (zero where the tap leaves its row).

    `y` is (Ce, Ho*W) with lanes flattened as ho*W + w; `mask_row` is the
    precomputed (1, Ho*W) validity mask for this tap offset `d`.
    """
    if d == 0:
        return y
    if d > 0:
        shifted = jnp.concatenate(
            [lax.slice_in_dim(y, d, HoW, axis=1),
             jnp.zeros((Ce, d), jnp.float32)], axis=1)
    else:
        shifted = jnp.concatenate(
            [jnp.zeros((Ce, -d), jnp.float32),
             lax.slice_in_dim(y, 0, HoW + d, axis=1)], axis=1)
    return shifted * mask_row


def _sepconv_kernel(x_ref, wh_ref, bh_ref, ww_ref, scale_ref, shift_ref,
                    mask_ref, o_ref, *, B, K, p, W, Cin, Ce, Cout, HoW):
    """Fused Separable_Conv2d forward for B images (stride 1), channel-major.

    x_ref     : (B, Cin, Hp*W)   H-padded input, spatial flattened on lanes
    wh_ref    : (Ce, K*Cin)      conv_h weights (channel repeat folded in)
    bh_ref    : (Ce, 1)          conv_h bias
    ww_ref    : (Cout, K*Ce)     conv_w weights, tap-major im2col layout
    scale_ref : (Cout, 1)        BN scale  = gamma / sqrt(var + eps)
    shift_ref : (Cout, 1)        BN shift  = (bw - mean)*scale + beta
    mask_ref  : (K, Ho*W)        per-tap W-edge validity masks (constants)
    o_ref     : (B, Cout, Ho*W)  lane-dense NC(H*W) output slab
    """
    wh = wh_ref[...]
    bh = bh_ref[...]
    ww = ww_ref[...]
    scale = scale_ref[...]
    shift = shift_ref[...]
    masks = mask_ref[...]                              # (K, Ho*W)

    for b in range(B):                                 # static unroll over images
        xf = x_ref[b]                                  # (Cin, Hp*W)

        # ---- conv_h: one im2col matmul along H (lane-dense output) ----------
        col_h = jnp.concatenate(
            [lax.slice_in_dim(xf, kh * W, kh * W + HoW, axis=1)
             for kh in range(K)], axis=0)              # (K*Cin, Ho*W)
        y = jnp.dot(wh, col_h,
                    preferred_element_type=jnp.float32) + bh   # (Ce, Ho*W)

        # ---- conv_w: roll-free shift + mask im2col, one matmul --------------
        taps = []
        for kw in range(K):
            d = kw - p
            m = lax.slice_in_dim(masks, kw, kw + 1, axis=0)    # (1, Ho*W)
            taps.append(_shifted_masked_tap(y, d, m, Ce, HoW))
        col_w = jnp.concatenate(taps, axis=0)          # (K*Ce, Ho*W)
        z = jnp.dot(ww, col_w,
                    preferred_element_type=jnp.float32)        # (Cout, Ho*W)

        # ---- fused epilogue: conv_w bias + inference BN + ReLU --------------
        o_ref[b] = jnp.maximum(z * scale + shift, 0.0).astype(o_ref.dtype)


# ------------------------------ host helpers ---------------------------------

def fold_params(params, *, kernel_size, depth_multiplier, eps=1e-5):
    """One-time weight folding (hoisted out of the per-call path)."""
    K, dm = kernel_size, depth_multiplier
    Ce = params["bh"].shape[0]
    Cin = Ce // dm
    Cout = params["bw"].shape[0]

    # Fold torch's x.repeat(1, dm, 1, 1) into conv_h:
    #   WH[ce, kh*Cin + ci] = sum_d wh[kh, d*Cin + ci, ce]
    wh = params["wh"].astype(jnp.float32).reshape(K, dm, Cin, Ce).sum(axis=1)
    WH = jnp.transpose(wh, (2, 0, 1)).reshape(Ce, K * Cin)
    bh = params["bh"].astype(jnp.float32).reshape(Ce, 1)

    # conv_w, tap-major im2col layout: WW[co, kw*Ce + ce] = ww[kw, ce, co]
    WW = jnp.transpose(params["ww"].astype(jnp.float32), (2, 0, 1)).reshape(Cout, K * Ce)

    # conv_w bias + inference BatchNorm folded to per-channel scale/shift.
    scale = (params["gamma"] / jnp.sqrt(params["var"] + eps)).astype(jnp.float32)
    shift = ((params["bw"] - params["mean"]) * scale + params["beta"]).astype(jnp.float32)
    return {"WH": WH, "bh": bh, "WW": WW,
            "scale": scale.reshape(Cout, 1), "shift": shift.reshape(Cout, 1)}


def _pick_images_per_step(n):
    """Largest block (<=8 images) that still leaves >=2 grid steps (v7x: 2 TCs)."""
    for b in range(min(n // 2, 8), 0, -1):
        if n % b == 0:
            return b
    return 1


def _xla_fallback(x, f, *, K, s, p, Cin, Ce, Cout):
    """XLA-conv fallback for stride>1 / over-padded configs (rare path)."""
    wh = f["WH"].reshape(Ce, K, Cin).transpose(0, 2, 1)[:, :, :, None]   # (Ce,Cin,K,1)
    y = lax.conv_general_dilated(x, wh, (s, 1), ((p, p), (0, 0)),
                                 dimension_numbers=("NCHW", "OIHW", "NCHW"))
    y = y + f["bh"].reshape(1, Ce, 1, 1)
    ww = f["WW"].reshape(Cout, K, Ce).transpose(0, 2, 1)[:, :, None, :]  # (Cout,Ce,1,K)
    z = lax.conv_general_dilated(y, ww, (1, s), ((0, 0), (p, p)),
                                 dimension_numbers=("NCHW", "OIHW", "NCHW"))
    z = z * f["scale"].reshape(1, Cout, 1, 1) + f["shift"].reshape(1, Cout, 1, 1)
    return jnp.maximum(z, 0.0)


# -------------------------------- wrapper -------------------------------------

def separable_conv2d(x_nchw, folded, *, kernel_size, stride=1, padding=0,
                     images_per_step=None):
    """Forward pass of Separable_Conv2d. Input/output layout: NCHW (f32)."""
    N, Cin, H, W = x_nchw.shape
    K, p, s = kernel_size, padding, stride
    Ce = folded["WH"].shape[0]
    Cout = folded["WW"].shape[0]

    Hp = H + 2 * p
    Ho = (Hp - K) // s + 1
    Wo = (W + 2 * p - K) // s + 1

    if s != 1 or Wo > W:
        # TODO(synk): stride>1 / Wo>W not handled by the fused Pallas kernel.
        return _xla_fallback(x_nchw.astype(jnp.float32), folded,
                             K=K, s=s, p=p, Cin=Cin, Ce=Ce, Cout=Cout)

    HpW, HoW = Hp * W, Ho * W

    # Tiny input prep: H-pad + flatten spatial onto the lane axis (a few KiB;
    # NO full-image transposes anywhere in the pipeline).
    x = x_nchw.astype(jnp.float32)
    if p > 0:
        x = jnp.pad(x, ((0, 0), (0, 0), (p, p), (0, 0)))
    x_flat = x.reshape(N, Cin, HpW)

    # Per-tap W-edge validity masks: constants (numpy), folded at trace time.
    w_of_lane = np.arange(HoW, dtype=np.int32) % W
    d_vals = np.arange(K, dtype=np.int32) - p
    masks = (((w_of_lane[None, :] + d_vals[:, None]) >= 0)
             & ((w_of_lane[None, :] + d_vals[:, None]) < W)).astype(np.float32)

    B = images_per_step if images_per_step is not None else _pick_images_per_step(N)
    assert N % B == 0, (N, B)

    kernel = functools.partial(
        _sepconv_kernel, B=B, K=K, p=p, W=W, Cin=Cin, Ce=Ce, Cout=Cout, HoW=HoW)

    flops = 2 * N * HoW * K * Ce * (Cin + Cout)
    bytes_accessed = 4 * (N * Cin * HpW + N * Cout * HoW
                          + Ce * K * Cin + Ce + Cout * K * Ce + 2 * Cout + K * HoW)
    # Real per-step working set (double-buffered blocks + weights + im2col
    # intermediates) with generous headroom -- fits easily on v5e/v6e/v7x.
    work = 4 * (2 * B * (Cin * HpW + Cout * HoW)
                + 2 * (Ce * K * Cin + Ce + Cout * K * Ce + 2 * Cout + K * HoW)
                + B * (K * Cin + 2 * Ce + K * Ce + Cout) * HoW)
    vmem_limit = int(min(96 * 1024 * 1024, max(4 * 1024 * 1024, 4 * work)))

    out_slab = pl.pallas_call(
        kernel,
        out_shape=jax.ShapeDtypeStruct((N, Cout, HoW), jnp.float32),
        grid_spec=pltpu.PrefetchScalarGridSpec(
            num_scalar_prefetch=0,
            grid=(N // B,),
            in_specs=[
                pl.BlockSpec((B, Cin, HpW), lambda n: (n, 0, 0)),
                pl.BlockSpec((Ce, K * Cin), lambda n: (0, 0)),
                pl.BlockSpec((Ce, 1), lambda n: (0, 0)),
                pl.BlockSpec((Cout, K * Ce), lambda n: (0, 0)),
                pl.BlockSpec((Cout, 1), lambda n: (0, 0)),
                pl.BlockSpec((Cout, 1), lambda n: (0, 0)),
                pl.BlockSpec((K, HoW), lambda n: (0, 0)),
            ],
            out_specs=pl.BlockSpec((B, Cout, HoW), lambda n: (n, 0, 0)),
        ),
        compiler_params=pltpu.CompilerParams(
            dimension_semantics=("parallel",),
            vmem_limit_bytes=vmem_limit,
        ),
        cost_estimate=pl.CostEstimate(flops=flops, transcendentals=0,
                                      bytes_accessed=bytes_accessed),
    )(x_flat, folded["WH"], folded["bh"], folded["WW"],
      folded["scale"], folded["shift"], jnp.asarray(masks))

    out = out_slab.reshape(N, Cout, Ho, W)
    if Wo < W:
        out = out[:, :, :, :Wo]
    return out


# --------------------------- pure-JAX reference -------------------------------

def separable_conv2d_ref(x_nchw, params, *, kernel_size, stride=1, padding=0,
                         depth_multiplier=8, eps=1e-5):
    """Unoptimized reference (explicit channel repeat, un-folded weights)."""
    x = jnp.tile(x_nchw, (1, depth_multiplier, 1, 1))
    x = jnp.transpose(x, (0, 2, 3, 1)).astype(jnp.float32)
    K, p, s = kernel_size, padding, stride

    xp = jnp.pad(x, ((0, 0), (p, p), (0, 0), (0, 0)))
    Ho = xp.shape[1] - K + 1
    y = sum(jnp.einsum("nhwc,cd->nhwd", xp[:, kh:kh + Ho], params["wh"][kh])
            for kh in range(K)) + params["bh"]
    y = y[:, ::s, :, :]

    yp = jnp.pad(y, ((0, 0), (0, 0), (p, p), (0, 0)))
    Wo = yp.shape[2] - K + 1
    z = sum(jnp.einsum("nhwc,cd->nhwd", yp[:, :, kw:kw + Wo], params["ww"][kw])
            for kw in range(K)) + params["bw"]
    z = z[:, :, ::s, :]

    scale = params["gamma"] / jnp.sqrt(params["var"] + eps)
    shift = params["beta"] - params["mean"] * scale
    out = jnp.maximum(z * scale + shift, 0.0)
    return jnp.transpose(out, (0, 3, 1, 2))


# ---------------------------------- main --------------------------------------

if __name__ == "__main__":
    in_channels, out_channels = 4, 16
    kernel_size, stride, padding, depth_multiplier = 3, 1, 1, 8
    cin_eff = in_channels * depth_multiplier            # 32

    key = jax.random.PRNGKey(0)
    k_x, k_wh, k_bh, k_ww, k_bw, k_g, k_b, k_m, k_v = jax.random.split(key, 9)

    # wh[kh, ci, co] <-> torch conv_h.weight[co, ci, kh, 0]   (3, 32, 32)
    # ww[kw, ci, co] <-> torch conv_w.weight[co, ci, 0, kw]   (3, 32, 16)
    params = {
        "wh":    jax.random.normal(k_wh, (kernel_size, cin_eff, cin_eff), jnp.float32) * 0.05,
        "bh":    jax.random.normal(k_bh, (cin_eff,), jnp.float32) * 0.1,
        "ww":    jax.random.normal(k_ww, (kernel_size, cin_eff, out_channels), jnp.float32) * 0.05,
        "bw":    jax.random.normal(k_bw, (out_channels,), jnp.float32) * 0.1,
        "gamma": 1.0 + 0.1 * jax.random.normal(k_g, (out_channels,), jnp.float32),
        "beta":  0.1 * jax.random.normal(k_b, (out_channels,), jnp.float32),
        "mean":  0.1 * jax.random.normal(k_m, (out_channels,), jnp.float32),
        "var":   0.5 + jnp.abs(jax.random.normal(k_v, (out_channels,), jnp.float32)),
    }

    x = jax.random.normal(k_x, (2, in_channels, 16, 16), jnp.float32)   # NCHW

    # Weight folding is done ONCE, outside the per-call path.
    folded = fold_params(params, kernel_size=kernel_size,
                         depth_multiplier=depth_multiplier)
    fwd = jax.jit(functools.partial(separable_conv2d, kernel_size=kernel_size,
                                    stride=stride, padding=padding))

    out = jax.block_until_ready(fwd(x, folded))

    ref = separable_conv2d_ref(x, params, kernel_size=kernel_size, stride=stride,
                               padding=padding, depth_multiplier=depth_multiplier)
    assert out.shape == (2, out_channels, 16, 16), out.shape
    err = float(jnp.max(jnp.abs(out - ref)))
    assert jnp.allclose(out, ref, atol=1e-4, rtol=1e-4), err

    print("KERNEL_OK")
</pallas_src>

<mosaic_0001>
module attributes {stable_mosaic.version = 11 : i64} {
  func.func @_sepconv_kernel(%arg0: i32, %arg1: memref<1x4x288xf32, #tpu.memory_space<vmem>>, %arg2: memref<32x12xf32, #tpu.memory_space<vmem>>, %arg3: memref<32x1xf32, #tpu.memory_space<vmem>>, %arg4: memref<16x96xf32, #tpu.memory_space<vmem>>, %arg5: memref<16x1xf32, #tpu.memory_space<vmem>>, %arg6: memref<16x1xf32, #tpu.memory_space<vmem>>, %arg7: memref<3x256xf32, #tpu.memory_space<vmem>>, %arg8: memref<1x16x256xf32, #tpu.memory_space<vmem>>) attributes {dimension_semantics = [#tpu.dimension_semantics<parallel>], iteration_bounds = array<i64: 2>, scalar_prefetch = 0 : i64, scratch_operands = 0 : i64, tpu.core_type = #tpu.core_type<tc>, window_params = [{transform_indices = @transform_0, window_bounds = array<i64: 1, 4, 288>}, {pipeline_mode = #tpu.pipeline_mode<synchronous>, transform_indices = @transform_1, window_bounds = array<i64: 32, 12>}, {pipeline_mode = #tpu.pipeline_mode<synchronous>, transform_indices = @transform_2, window_bounds = array<i64: 32, 1>}, {pipeline_mode = #tpu.pipeline_mode<synchronous>, transform_indices = @transform_3, window_bounds = array<i64: 16, 96>}, {pipeline_mode = #tpu.pipeline_mode<synchronous>, transform_indices = @transform_4, window_bounds = array<i64: 16, 1>}, {pipeline_mode = #tpu.pipeline_mode<synchronous>, transform_indices = @transform_5, window_bounds = array<i64: 16, 1>}, {pipeline_mode = #tpu.pipeline_mode<synchronous>, transform_indices = @transform_6, window_bounds = array<i64: 3, 256>}, {transform_indices = @transform_7, window_bounds = array<i64: 1, 16, 256>}]} {
    %c0 = arith.constant 0 : index
    %c0_0 = arith.constant 0 : index
    %0 = vector.load %arg2[%c0, %c0_0] : memref<32x12xf32, #tpu.memory_space<vmem>>, vector<32x12xf32>
    %c0_1 = arith.constant 0 : index
    %c0_2 = arith.constant 0 : index
    %1 = vector.load %arg3[%c0_1, %c0_2] : memref<32x1xf32, #tpu.memory_space<vmem>>, vector<32x1xf32>
    %c0_3 = arith.constant 0 : index
    %c0_4 = arith.constant 0 : index
    %2 = vector.load %arg4[%c0_3, %c0_4] : memref<16x96xf32, #tpu.memory_space<vmem>>, vector<16x96xf32>
    %c0_5 = arith.constant 0 : index
    %c0_6 = arith.constant 0 : index
    %3 = vector.load %arg5[%c0_5, %c0_6] : memref<16x1xf32, #tpu.memory_space<vmem>>, vector<16x1xf32>
    %c0_7 = arith.constant 0 : index
    %c0_8 = arith.constant 0 : index
    %4 = vector.load %arg6[%c0_7, %c0_8] : memref<16x1xf32, #tpu.memory_space<vmem>>, vector<16x1xf32>
    %c0_9 = arith.constant 0 : index
    %c0_10 = arith.constant 0 : index
    %5 = vector.load %arg7[%c0_9, %c0_10] : memref<3x256xf32, #tpu.memory_space<vmem>>, vector<3x256xf32>
    %c0_11 = arith.constant 0 : index
    %c0_12 = arith.constant 0 : index
    %c0_13 = arith.constant 0 : index
    %6 = vector.load %arg1[%c0_11, %c0_12, %c0_13] : memref<1x4x288xf32, #tpu.memory_space<vmem>>, vector<1x4x288xf32>
    %7 = vector.shape_cast %6 : vector<1x4x288xf32> to vector<4x288xf32>
    %8 = vector.extract_strided_slice %7 {offsets = [0, 0], sizes = [4, 256], strides = [1, 1]} : vector<4x288xf32> to vector<4x256xf32>
    %9 = vector.extract_strided_slice %7 {offsets = [0, 16], sizes = [4, 256], strides = [1, 1]} : vector<4x288xf32> to vector<4x256xf32>
    %10 = vector.extract_strided_slice %7 {offsets = [0, 32], sizes = [4, 256], strides = [1, 1]} : vector<4x288xf32> to vector<4x256xf32>
    %11 = tpu.concatenate %8, %9, %10 in 0 : vector<4x256xf32>, vector<4x256xf32>, vector<4x256xf32> -> vector<12x256xf32>
    %cst = arith.constant dense<0.000000e+00> : vector<32x256xf32>
    %12 = tpu.matmul %0, %11, %cst {dimension_numbers = #tpu.dot_dimension_numbers<[1], [0], [0], [1], [0, 0, 1, 1], [], []>} : vector<32x12xf32>, vector<12x256xf32>, vector<32x256xf32> -> vector<32x256xf32>
    %13 = vector.broadcast %1 : vector<32x1xf32> to vector<32x256xf32>
    %14 = arith.addf %12, %13 : vector<32x256xf32>
    %15 = vector.extract_strided_slice %5 {offsets = [0, 0], sizes = [1, 256], strides = [1, 1]} : vector<3x256xf32> to vector<1x256xf32>
    %cst_14 = arith.constant 0.000000e+00 : f32
    %16 = vector.broadcast %cst_14 : f32 to vector<32x1xf32>
    %17 = vector.extract_strided_slice %14 {offsets = [0, 0], sizes = [32, 255], strides = [1, 1]} : vector<32x256xf32> to vector<32x255xf32>
    %18 = tpu.concatenate %16, %17 in 1 : vector<32x1xf32>, vector<32x255xf32> -> vector<32x256xf32>
    %19 = vector.broadcast %15 : vector<1x256xf32> to vector<32x256xf32>
    %20 = arith.mulf %18, %19 : vector<32x256xf32>
    %21 = vector.extract_strided_slice %5 {offsets = [2, 0], sizes = [1, 256], strides = [1, 1]} : vector<3x256xf32> to vector<1x256xf32>
    %22 = vector.extract_strided_slice %14 {offsets = [0, 1], sizes = [32, 255], strides = [1, 1]} : vector<32x256xf32> to vector<32x255xf32>
    %cst_15 = arith.constant 0.000000e+00 : f32
    %23 = vector.broadcast %cst_15 : f32 to vector<32x1xf32>
    %24 = tpu.concatenate %22, %23 in 1 : vector<32x255xf32>, vector<32x1xf32> -> vector<32x256xf32>
    %25 = vector.broadcast %21 : vector<1x256xf32> to vector<32x256xf32>
    %26 = arith.mulf %24, %25 : vector<32x256xf32>
    %27 = tpu.concatenate %20, %14, %26 in 0 : vector<32x256xf32>, vector<32x256xf32>, vector<32x256xf32> -> vector<96x256xf32>
    %cst_16 = arith.constant dense<0.000000e+00> : vector<16x256xf32>
    %28 = tpu.matmul %2, %27, %cst_16 {dimension_numbers = #tpu.dot_dimension_numbers<[1], [0], [0], [1], [0, 0, 1, 1], [], []>} : vector<16x96xf32>, vector<96x256xf32>, vector<16x256xf32> -> vector<16x256xf32>
    %29 = vector.broadcast %3 : vector<16x1xf32> to vector<16x256xf32>
    %30 = arith.mulf %28, %29 : vector<16x256xf32>
    %31 = vector.broadcast %4 : vector<16x1xf32> to vector<16x256xf32>
    %32 = arith.addf %30, %31 : vector<16x256xf32>
    %cst_17 = arith.constant 0.000000e+00 : f32
    %33 = vector.broadcast %cst_17 : f32 to vector<16x256xf32>
    %34 = arith.maximumf %32, %33 : vector<16x256xf32>
    %c0_18 = arith.constant 0 : index
    %c0_19 = arith.constant 0 : index
    %c0_20 = arith.constant 0 : index
    %35 = vector.load %arg8[%c0_18, %c0_19, %c0_20] : memref<1x16x256xf32, #tpu.memory_space<vmem>>, vector<1x16x256xf32>
    %36 = vector.shape_cast %35 : vector<1x16x256xf32> to vector<16x256xf32>
    %37 = vector.shape_cast %34 : vector<16x256xf32> to vector<1x16x256xf32>
    tpu.vector_store %arg8[%c0_18, %c0_19, %c0_20], %37 {strides = array<i32>} : memref<1x16x256xf32, #tpu.memory_space<vmem>>, vector<1x16x256xf32>,
    return
  }
  func.func @transform_0(%arg0: i32) -> (i32, i32, i32) {
    %c0_i32 = arith.constant 0 : i32
    %c0_i32_0 = arith.constant 0 : i32
    %c0_i32_1 = arith.constant 0 : i32
    return %arg0, %c0_i32, %c0_i32_0 : i32, i32, i32
  }
  func.func @transform_1(%arg0: i32) -> (i32, i32) {
    %c0_i32 = arith.constant 0 : i32
    %c0_i32_0 = arith.constant 0 : i32
    %c0_i32_1 = arith.constant 0 : i32
    return %c0_i32, %c0_i32_0 : i32, i32
  }
  func.func @transform_2(%arg0: i32) -> (i32, i32) {
    %c0_i32 = arith.constant 0 : i32
    %c0_i32_0 = arith.constant 0 : i32
    %c0_i32_1 = arith.constant 0 : i32
    return %c0_i32, %c0_i32_0 : i32, i32
  }
  func.func @transform_3(%arg0: i32) -> (i32, i32) {
    %c0_i32 = arith.constant 0 : i32
    %c0_i32_0 = arith.constant 0 : i32
    %c0_i32_1 = arith.constant 0 : i32
    return %c0_i32, %c0_i32_0 : i32, i32
  }
  func.func @transform_4(%arg0: i32) -> (i32, i32) {
    %c0_i32 = arith.constant 0 : i32
    %c0_i32_0 = arith.constant 0 : i32
    %c0_i32_1 = arith.constant 0 : i32
    return %c0_i32, %c0_i32_0 : i32, i32
  }
  func.func @transform_5(%arg0: i32) -> (i32, i32) {
    %c0_i32 = arith.constant 0 : i32
    %c0_i32_0 = arith.constant 0 : i32
    %c0_i32_1 = arith.constant 0 : i32
    return %c0_i32, %c0_i32_0 : i32, i32
  }
  func.func @transform_6(%arg0: i32) -> (i32, i32) {
    %c0_i32 = arith.constant 0 : i32
    %c0_i32_0 = arith.constant 0 : i32
    %c0_i32_1 = arith.constant 0 : i32
    return %c0_i32, %c0_i32_0 : i32, i32
  }
  func.func @transform_7(%arg0: i32) -> (i32, i32, i32) {
    %c0_i32 = arith.constant 0 : i32
    %c0_i32_0 = arith.constant 0 : i32
    %c0_i32_1 = arith.constant 0 : i32
    return %arg0, %c0_i32, %c0_i32_0 : i32, i32, i32
  }
}

</mosaic_0001>

<llo_original>
// kernel: separable_conv2d.1
$region0: #{separable_conv2d.1}
  #allocation0 [shape = 'u32[]', space=smem, size = 0x4, offset = 0x4, fixed_abs, tag = 'smem constant byte address 0x4 - core index']
  #allocation1 [shape = 'u32[72,128]{1,0:T(1,128)}', space=vmem, size = 0x9000, scoped, tag = 'internal scratch']
  %s0 = inlined_call_operand.vmem [shape: f32[2,4,288], index: 0, kind: input, shape index: {}]
  %s1 = inlined_call_operand.vmem [shape: f32[32,12], index: 1, kind: input, shape index: {}]
  %s2 = inlined_call_operand.vmem [shape: f32[32,1], index: 2, kind: input, shape index: {}]
  %s3 = inlined_call_operand.vmem [shape: f32[16,96], index: 3, kind: input, shape index: {}]
  %s4 = inlined_call_operand.vmem [shape: f32[16,1], index: 4, kind: input, shape index: {}]
  %s5 = inlined_call_operand.vmem [shape: f32[16,1], index: 5, kind: input, shape index: {}]
  %s6 = inlined_call_operand.vmem [shape: f32[3,256], index: 6, kind: input, shape index: {}]
  %s7 = inlined_call_operand.vmem [shape: f32[2,16,256], index: 7, kind: output, shape index: {}]
  %s8 = sld [smem:[#allocation0]]
  $region61: #{separable_conv2d.1} parent=0
    _
  %s10 = ssub.s32 1, %s8
  %s11 = scalar_select 0, %s10, %s8
  loop: start=0, step=1, limit=4
  $region2: #{separable_conv2d.1} parent=0 // loop_pre_header
    _
  $region3: #{separable_conv2d.1} parent=0 // loop_header
    %s13 = sphi 0, %s17
    %p14 = scmp.ge.s32.totalorder %s13, 4
    %s23 = sphi 0, %s25
    %s26 = sphi 0, %s23
    %s27 = sphi 0, %s26
    %s43 = sphi 0, %s27
    %s47 = sphi 0, %s47
    %s49 = sphi 0, %s47
    %s50 = sphi 0, %s49
    %s64 = sphi 0, %s50
    %s68 = sphi 0, %s68
    %s70 = sphi 0, %s68
    %s71 = sphi 0, %s70
    %s85 = sphi 0, %s71
    %s89 = sphi 0, %s89
    %s91 = sphi 0, %s89
    %s92 = sphi 0, %s91
    %s106 = sphi 0, %s92
    %s110 = sphi 0, %s110
    %s112 = sphi 0, %s110
    %s113 = sphi 0, %s112
    %s127 = sphi 0, %s113
    %s131 = sphi 0, %s131
    %s133 = sphi 0, %s131
    %s134 = sphi 0, %s133
    %s148 = sphi 0, %s134
    %s152 = sphi 0, %s152
    %s154 = sphi 0, %s152
    %s155 = sphi 0, %s154
    %s169 = sphi 0, %s155
    %s175 = sphi 0, %s177
    %s178 = sphi 0, %s175
    %s179 = sphi 0, %s178
    %s195 = sphi 0, %s179
  $region4: #{separable_conv2d.1} parent=0 // loop_header_branch
    %16 = sbr.rel (%p14) target = $region8
  $region5: #{separable_conv2d.1} parent=0 // loop_body
    %s18 = ssub.s32 %s13, 1
    %s19 = ssub.s32 %s13, 2
    %s20 = sadd.s32 %s13, 1
    %s21 = ssub.s32 %s13, %s20
    %p22 = scmp.eq.s32.totalorder %s21, 0
    %s24 = sadd.s32 %s23, 1
    %s25 = scalar_select %p22, %s23, %s24
    %p28 = pneg %p22
    %p29 = scmp.eq.s32.totalorder %s13, 1
    %p30 = por %p28, %p29
    %p31 = scmp.ne.s32.totalorder %s23, %s26
    %p32 = scmp.eq.s32.totalorder %s13, 0
    %p33 = por %p31, %p32
    %p34 = scmp.ne.s32.totalorder %s23, %s26
    %p35 = scmp.eq.s32.totalorder %s18, 1
    %p36 = por %p34, %p35
    %p37 = scmp.ne.s32.totalorder %s26, %s27
    %p38 = scmp.eq.s32.totalorder %s18, 0
    %p39 = por %p37, %p38
    %p40 = scmp.ne.s32.totalorder %s26, %s27
    %p41 = scmp.eq.s32.totalorder %s19, 1
    %p42 = por %p40, %p41
    %p44 = scmp.ne.s32.totalorder %s27, %s43
    %p45 = scmp.eq.s32.totalorder %s19, 0
    %p46 = por %p44, %p45
    %s48 = sadd.s32 %s47, 1
    %p51 = scmp.eq.s32.totalorder %s13, 1
    %p52 = scmp.ne.s32.totalorder %s47, %s49
    %p53 = scmp.eq.s32.totalorder %s13, 0
    %p54 = por %p52, %p53
    %p55 = scmp.ne.s32.totalorder %s47, %s49
    %p56 = scmp.eq.s32.totalorder %s18, 1
    %p57 = por %p55, %p56
    %p58 = scmp.ne.s32.totalorder %s49, %s50
    %p59 = scmp.eq.s32.totalorder %s18, 0
    %p60 = por %p58, %p59
    %p61 = scmp.ne.s32.totalorder %s49, %s50
    %p62 = scmp.eq.s32.totalorder %s19, 1
    %p63 = por %p61, %p62
    %p65 = scmp.ne.s32.totalorder %s50, %s64
    %p66 = scmp.eq.s32.totalorder %s19, 0
    %p67 = por %p65, %p66
    %s69 = sadd.s32 %s68, 1
    %p72 = scmp.eq.s32.totalorder %s13, 1
    %p73 = scmp.ne.s32.totalorder %s68, %s70
    %p74 = scmp.eq.s32.totalorder %s13, 0
    %p75 = por %p73, %p74
    %p76 = scmp.ne.s32.totalorder %s68, %s70
    %p77 = scmp.eq.s32.totalorder %s18, 1
    %p78 = por %p76, %p77
    %p79 = scmp.ne.s32.totalorder %s70, %s71
    %p80 = scmp.eq.s32.totalorder %s18, 0
    %p81 = por %p79, %p80
    %p82 = scmp.ne.s32.totalorder %s70, %s71
    %p83 = scmp.eq.s32.totalorder %s19, 1
    %p84 = por %p82, %p83
    %p86 = scmp.ne.s32.totalorder %s71, %s85
    %p87 = scmp.eq.s32.totalorder %s19, 0
    %p88 = por %p86, %p87
    %s90 = sadd.s32 %s89, 1
    %p93 = scmp.eq.s32.totalorder %s13, 1
    %p94 = scmp.ne.s32.totalorder %s89, %s91
    %p95 = scmp.eq.s32.totalorder %s13, 0
    %p96 = por %p94, %p95
    %p97 = scmp.ne.s32.totalorder %s89, %s91
    %p98 = scmp.eq.s32.totalorder %s18, 1
    %p99 = por %p97, %p98
    %p100 = scmp.ne.s32.totalorder %s91, %s92
    %p101 = scmp.eq.s32.totalorder %s18, 0
    %p102 = por %p100, %p101
    %p103 = scmp.ne.s32.totalorder %s91, %s92
    %p104 = scmp.eq.s32.totalorder %s19, 1
    %p105 = por %p103, %p104
    %p107 = scmp.ne.s32.totalorder %s92, %s106
    %p108 = scmp.eq.s32.totalorder %s19, 0
    %p109 = por %p107, %p108
    %s111 = sadd.s32 %s110, 1
    %p114 = scmp.eq.s32.totalorder %s13, 1
    %p115 = scmp.ne.s32.totalorder %s110, %s112
    %p116 = scmp.eq.s32.totalorder %s13, 0
    %p117 = por %p115, %p116
    %p118 = scmp.ne.s32.totalorder %s110, %s112
    %p119 = scmp.eq.s32.totalorder %s18, 1
    %p120 = por %p118, %p119
    %p121 = scmp.ne.s32.totalorder %s112, %s113
    %p122 = scmp.eq.s32.totalorder %s18, 0
    %p123 = por %p121, %p122
    %p124 = scmp.ne.s32.totalorder %s112, %s113
    %p125 = scmp.eq.s32.totalorder %s19, 1
    %p126 = por %p124, %p125
    %p128 = scmp.ne.s32.totalorder %s113, %s127
    %p129 = scmp.eq.s32.totalorder %s19, 0
    %p130 = por %p128, %p129
    %s132 = sadd.s32 %s131, 1
    %p135 = scmp.eq.s32.totalorder %s13, 1
    %p136 = scmp.ne.s32.totalorder %s131, %s133
    %p137 = scmp.eq.s32.totalorder %s13, 0
    %p138 = por %p136, %p137
    %p139 = scmp.ne.s32.totalorder %s131, %s133
    %p140 = scmp.eq.s32.totalorder %s18, 1
    %p141 = por %p139, %p140
    %p142 = scmp.ne.s32.totalorder %s133, %s134
    %p143 = scmp.eq.s32.totalorder %s18, 0
    %p144 = por %p142, %p143
    %p145 = scmp.ne.s32.totalorder %s133, %s134
    %p146 = scmp.eq.s32.totalorder %s19, 1
    %p147 = por %p145, %p146
    %p149 = scmp.ne.s32.totalorder %s134, %s148
    %p150 = scmp.eq.s32.totalorder %s19, 0
    %p151 = por %p149, %p150
    %s153 = sadd.s32 %s152, 1
    %p156 = scmp.eq.s32.totalorder %s13, 1
    %p157 = scmp.ne.s32.totalorder %s152, %s154
    %p158 = scmp.eq.s32.totalorder %s13, 0
    %p159 = por %p157, %p158
    %p160 = scmp.ne.s32.totalorder %s152, %s154
    %p161 = scmp.eq.s32.totalorder %s18, 1
    %p162 = por %p160, %p161
    %p163 = scmp.ne.s32.totalorder %s154, %s155
    %p164 = scmp.eq.s32.totalorder %s18, 0
    %p165 = por %p163, %p164
    %p166 = scmp.ne.s32.totalorder %s154, %s155
    %p167 = scmp.eq.s32.totalorder %s19, 1
    %p168 = por %p166, %p167
    %p170 = scmp.ne.s32.totalorder %s155, %s169
    %p171 = scmp.eq.s32.totalorder %s19, 0
    %p172 = por %p170, %p171
    %s173 = ssub.s32 %s13, %s20
    %p174 = scmp.eq.s32.totalorder %s173, 0
    %s176 = sadd.s32 %s175, 1
    %s177 = scalar_select %p174, %s175, %s176
    %p180 = pneg %p174
    %p181 = scmp.eq.s32.totalorder %s13, 1
    %p182 = por %p180, %p181
    %p183 = scmp.ne.s32.totalorder %s175, %s178
    %p184 = scmp.eq.s32.totalorder %s13, 0
    %p185 = por %p183, %p184
    %p186 = scmp.ne.s32.totalorder %s175, %s178
    %p187 = scmp.eq.s32.totalorder %s18, 1
    %p188 = por %p186, %p187
    %p189 = scmp.ne.s32.totalorder %s178, %s179
    %p190 = scmp.eq.s32.totalorder %s18, 0
    %p191 = por %p189, %p190
    %p192 = scmp.ne.s32.totalorder %s178, %s179
    %p193 = scmp.eq.s32.totalorder %s19, 1
    %p194 = por %p192, %p193
    %p196 = scmp.ne.s32.totalorder %s179, %s195
    %p197 = scmp.eq.s32.totalorder %s19, 0
    %p198 = por %p196, %p197
    %p199 = scmp.le.s32.totalorder 1, %s13
    %p200 = scmp.lt.s32.totalorder %s13, 3
    %p201 = pnand %p199, %p200
    %p202 = pneg %p201
    // Predicated region
    $region9: #{separable_conv2d.1} parent=5 // pred_check
      _
    $region10: #{separable_conv2d.1} parent=5 // pred_check_branch
      %204 = sbr.rel (%p201) target = $region12
    $region11: #{separable_conv2d.1} parent=5 // pred_region
      %s205 = ssub.s32 %s13, 1
      // Predicated region
      $region13: #{separable_conv2d.1} parent=11 // pred_check
        %p206 = pneg %p60
      $region14: #{separable_conv2d.1} parent=11 // pred_check_branch
        %208 = sbr.rel (%p206) target = $region16
      $region15: #{separable_conv2d.1} parent=11 // pred_region
        _
      $region16: #{separable_conv2d.1} parent=11 // pred_fallthru
        _
      // Predicated region
      $region17: #{separable_conv2d.1} parent=11 // pred_check
        %p209 = pneg %p81
      $region18: #{separable_conv2d.1} parent=11 // pred_check_branch
        %211 = sbr.rel (%p209) target = $region20
      $region19: #{separable_conv2d.1} parent=11 // pred_region
        _
      $region20: #{separable_conv2d.1} parent=11 // pred_fallthru
        _
      // Predicated region
      $region21: #{separable_conv2d.1} parent=11 // pred_check
        %p212 = pneg %p102
      $region22: #{separable_conv2d.1} parent=11 // pred_check_branch
        %214 = sbr.rel (%p212) target = $region24
      $region23: #{separable_conv2d.1} parent=11 // pred_region
        _
      $region24: #{separable_conv2d.1} parent=11 // pred_fallthru
        _
      // Predicated region
      $region25: #{separable_conv2d.1} parent=11 // pred_check
        %p215 = pneg %p123
      $region26: #{separable_conv2d.1} parent=11 // pred_check_branch
        %217 = sbr.rel (%p215) target = $region28
      $region27: #{separable_conv2d.1} parent=11 // pred_region
        _
      $region28: #{separable_conv2d.1} parent=11 // pred_fallthru
        _
      // Predicated region
      $region29: #{separable_conv2d.1} parent=11 // pred_check
        %p218 = pneg %p144
      $region30: #{separable_conv2d.1} parent=11 // pred_check_branch
        %220 = sbr.rel (%p218) target = $region32
      $region31: #{separable_conv2d.1} parent=11 // pred_region
        _
      $region32: #{separable_conv2d.1} parent=11 // pred_fallthru
        _
      // Predicated region
      $region33: #{separable_conv2d.1} parent=11 // pred_check
        %p221 = pneg %p165
      $region34: #{separable_conv2d.1} parent=11 // pred_check_branch
        %223 = sbr.rel (%p221) target = $region36
      $region35: #{separable_conv2d.1} parent=11 // pred_region
        _
      $region36: #{separable_conv2d.1} parent=11 // pred_fallthru
        _
    $region12: #{separable_conv2d.1} parent=5 // pred_fallthru
      _
    %p224 = scmp.lt.s32.totalorder %s13, 2
    // Predicated region
    $region37: #{separable_conv2d.1} parent=5 // pred_check
      %p225 = pneg %p224
    $region38: #{separable_conv2d.1} parent=5 // pred_check_branch
      %227 = sbr.rel (%p225) target = $region40
    $region39: #{separable_conv2d.1} parent=5 // pred_region
      // Predicated region
      $region41: #{separable_conv2d.1} parent=39 // pred_check
        %p228 = pneg %p33
      $region42: #{separable_conv2d.1} parent=39 // pred_check_branch
        %230 = sbr.rel (%p228) target = $region44
      $region43: #{separable_conv2d.1} parent=39 // pred_region
        %p231 = scmp.lt.s32.totalorder %s13, 1
        %s232 = scalar_select %p231, %s13, 1
        %s233 = smul.addr %s232, 3
        %s234 = smul.addr %s233, 4
        %s235 = scalar_lea.vmem %s0, %s234
      $region44: #{separable_conv2d.1} parent=39 // pred_fallthru
        _
    $region40: #{separable_conv2d.1} parent=5 // pred_fallthru
      _
    %p236 = scmp.le.s32.totalorder 1, %s13
    %p237 = scmp.lt.s32.totalorder %s13, 3
    %p238 = pnand %p236, %p237
    %p239 = pneg %p238
    // Predicated region
    $region45: #{separable_conv2d.1} parent=5 // pred_check
      _
    $region46: #{separable_conv2d.1} parent=5 // pred_check_branch
      %241 = sbr.rel (%p238) target = $region48
    $region47: #{separable_conv2d.1} parent=5 // pred_region
      %s242 = ssub.s32 %s13, 1
      %p243 = scmp.lt.s32.totalorder %s18, 1
      %s244 = scalar_select %p243, %s18, 1
      %s245 = smul.addr %s244, 3
      %s246 = smul.addr %s245, 4
      %s247 = scalar_lea.vmem %s0, %s246
      %p248 = pneg %p39
      %p249 = pneg %p36
      %p250 = pneg %p60
      %p251 = pneg %p57
      %p252 = pneg %p81
      %p253 = pneg %p78
      %p254 = pneg %p102
      %p255 = pneg %p99
      %p256 = pneg %p123
      %p257 = pneg %p120
      %p258 = pneg %p144
      %p259 = pneg %p141
      %p260 = pneg %p165
      %p261 = pneg %p162
      %p262 = pneg %p191
      %p263 = pneg %p188
      %p264 = scmp.lt.s32.totalorder %s18, 1
      %s265 = scalar_select %p264, %s18, 1
      %s266 = smul.addr %s265, 4
      %s267 = smul.addr %s266, 8
      %s268 = scalar_lea.vmem %s7, %s267
      %p269 = scmp.lt.s32.totalorder %s18, 1
      %s270 = scalar_select %p269, %s18, 1
      %s271 = smul.addr %s270, 3
      %s272 = smul.addr %s271, 4
      %s273 = scalar_lea.vmem %s0, %s272
      %p274 = scmp.lt.s32.totalorder %s18, 1
      %s275 = scalar_select %p274, %s18, 1
      %s276 = smul.addr %s275, 4
      %s277 = smul.addr %s276, 8
      %s278 = scalar_lea.vmem %s7, %s277
      %v279 = vld [vmem:[%s1] sm:$0xff]
      %v280 = vld [vmem:[%s1 + $0x8] sm:$0xff]
      %v281 = vld [vmem:[%s1 + $0x10] sm:$0xff]
      %v282 = vld [vmem:[%s1 + $0x18] sm:$0xff]
      %v283 = vld [vmem:[%s2] sm:$0xff]
      %v284 = vld [vmem:[%s2 + $0x8] sm:$0xff]
      %v285 = vld [vmem:[%s2 + $0x10] sm:$0xff]
      %v286 = vld [vmem:[%s2 + $0x18] sm:$0xff]
      %v287 = vld [vmem:[%s3] sm:$0xff]
      %v288 = vld [vmem:[%s3 + $0x8] sm:$0xff]
      %v289 = vld [vmem:[%s4] sm:$0xff]
      %v290 = vld [vmem:[%s4 + $0x8] sm:$0xff]
      %v291 = vld [vmem:[%s5] sm:$0xff]
      %v292 = vld [vmem:[%s5 + $0x8] sm:$0xff]
      %v293 = vld [vmem:[%s6] sm:$0x77]
      %v294 = vld [vmem:[%s273] sm:$0xff]
      %v295 = vld [vmem:[%s273 + $0x8] sm:$0xf]
      %297 = vst [vmem:[#allocation1] ss:$2 sm:$0xff] %v294
      %v298 = vld.sshfl [vmem:[#allocation1] sm:$0xff pattern:$0x75316420]
      %v299 = vld.sshfl [vmem:[#allocation1 + $0x8] sm:$0xff pattern:$0x75316420]
      %s303 = scalar_lea.vmem [#allocation1], 1
      %304 = vst [vmem:[%s303] ss:$2 sm:$0xff] %v294
      %s305 = scalar_lea.vmem [#allocation1], 17
      %306 = vst [vmem:[%s305] ss:$2 sm:$0xff] %v295
      %v307 = vld.sshfl [vmem:[#allocation1] sm:$0xff pattern:$0x75316420]
      %v308 = vld.sshfl [vmem:[#allocation1 + $0x8] sm:$0xff pattern:$0x75316420]
      %v309 = vld.sshfl [vmem:[#allocation1 + $0x10] sm:$0xff pattern:$0x75316420]
      %310 = vrot.lane.b32.xlu0 %v307, 112
      %v311 = vpop.permute.xlu0 %310
      %312 = vrot.lane.b32.xlu0 %v308, 112
      %v313 = vpop.permute.xlu0 %312
      %314 = vrot.lane.b32.xlu0 %v309, 112
      %v315 = vpop.permute.xlu0 %314
      %vm316 = vcmask 916480
      %v317 = vsel %vm316, %v311, %v313
      %v318 = vsel %vm316, %v313, %v315
      %321 = vst [vmem:[#allocation1] ss:$2 sm:$0xff] %v294
      %s322 = scalar_lea.vmem [#allocation1], 16
      %323 = vst [vmem:[%s322] ss:$2 sm:$0xff] %v295
      %v324 = vld.sshfl [vmem:[#allocation1] sm:$0xff pattern:$0x75316420]
      %v325 = vld.sshfl [vmem:[#allocation1 + $0x8] sm:$0xff pattern:$0x75316420]
      %v326 = vld.sshfl [vmem:[#allocation1 + $0x10] sm:$0xff pattern:$0x75316420]
      %327 = vrot.lane.b32.xlu0 %v324, 96
      %v328 = vpop.permute.xlu0 %327
      %329 = vrot.lane.b32.xlu0 %v325, 96
      %v330 = vpop.permute.xlu0 %329
      %331 = vrot.lane.b32.xlu0 %v326, 96
      %v332 = vpop.permute.xlu0 %331
      %vm333 = vcmask 785408
      %v334 = vsel %vm333, %v328, %v330
      %v335 = vsel %vm333, %v330, %v332
      %vm336 = vcmask 1043456
      %v337 = vsel %vm336, %v298, %v317
      %v338 = vsel %vm336, %v299, %v318
      %340 = vset.pattern.permute.xlu0 0
      %341 = vperm.xlu0 %340, %v283
      %v342 = vpop.permute.xlu0 %341
      %345 = vset.pattern.permute.xlu0 0
      %346 = vperm.xlu0 %345, %v284
      %v347 = vpop.permute.xlu0 %346
      %350 = vset.pattern.permute.xlu0 0
      %351 = vperm.xlu0 %350, %v285
      %v352 = vpop.permute.xlu0 %351
      %355 = vset.pattern.permute.xlu0 0
      %356 = vperm.xlu0 %355, %v286
      %v357 = vpop.permute.xlu0 %356
      %vm359 = vcmask 97280
      %v361 = vsel %vm359, %v279, 0
      %v364 = vsel %vm359, %v280, 0
      %v367 = vsel %vm359, %v281, 0
      %v370 = vsel %vm359, %v282, 0
      %v372 = vsel %vm336, %v334, 0
      %v374 = vsel %vm336, %v335, 0
      %376 = vmatpush.msra.mxu0 0.0
      %377 = vmatpush.msra.mxu0 0.0
      %378 = vmatpush.msra.mxu0 0.0
      %379 = vmatpush.msra.mxu0 0.0
      %380 = vmatpush.msra.mxu0 0.0
      %381 = vmatpush.msra.mxu0 0.0
      %382 = vmatpush.msra.mxu0 0.0
      %383 = vmatpush.msra.mxu0 0.0
      %384 = vmatpush.msra.mxu0 0.0
      %385 = vmatpush.msra.mxu0 0.0
      %386 = vmatpush.msra.mxu0 0.0
      %387 = vmatpush.msra.mxu0 0.0
      %388 = vmatpush.msra.mxu0 0.0
      %389 = vmatpush.msra.mxu0 0.0
      %390 = vmatpush.msra.mxu0 %v372
      %391 = vmatpush.msra.mxu0 %v337
      %392 = vmatmul.f32.gmra.mxu0 %v361
      %v393 = vpop.f32.mrf.mxu0
      %v394 = vadd.f32 %v342, %v393
      %395 = vmatmul.f32.gmra.mxu0 %v364
      %v396 = vpop.f32.mrf.mxu0
      %v397 = vadd.f32 %v347, %v396
      %398 = vmatmul.f32.gmra.mxu0 %v367
      %v399 = vpop.f32.mrf.mxu0
      %v400 = vadd.f32 %v352, %v399
      %401 = vmatmul.f32.gmra.mxu0 %v370
      %v402 = vpop.f32.mrf.mxu0
      %v403 = vadd.f32 %v357, %v402
      %404 = vdwg.mxu0
      %405 = vmatpush.msra.mxu0 0.0
      %406 = vmatpush.msra.mxu0 0.0
      %407 = vmatpush.msra.mxu0 0.0
      %408 = vmatpush.msra.mxu0 0.0
      %409 = vmatpush.msra.mxu0 0.0
      %410 = vmatpush.msra.mxu0 0.0
      %411 = vmatpush.msra.mxu0 0.0
      %412 = vmatpush.msra.mxu0 0.0
      %413 = vmatpush.msra.mxu0 0.0
      %414 = vmatpush.msra.mxu0 0.0
      %415 = vmatpush.msra.mxu0 0.0
      %416 = vmatpush.msra.mxu0 0.0
      %417 = vmatpush.msra.mxu0 0.0
      %418 = vmatpush.msra.mxu0 0.0
      %419 = vmatpush.msra.mxu0 %v374
      %420 = vmatpush.msra.mxu0 %v338
      %421 = vmatmul.f32.gmra.mxu0 %v361
      %v422 = vpop.f32.mrf.mxu0
      %v423 = vadd.f32 %v342, %v422
      %424 = vmatmul.f32.gmra.mxu0 %v364
      %v425 = vpop.f32.mrf.mxu0
      %v426 = vadd.f32 %v347, %v425
      %427 = vmatmul.f32.gmra.mxu0 %v367
      %v428 = vpop.f32.mrf.mxu0
      %v429 = vadd.f32 %v352, %v428
      %430 = vmatmul.f32.gmra.mxu0 %v370
      %v431 = vpop.f32.mrf.mxu0
      %v432 = vadd.f32 %v357, %v431
      %433 = vdwg.mxu0
      %442 = vrot.lane.b32.xlu0 %v394, 1
      %v443 = vpop.permute.xlu0 %442
      %444 = vrot.lane.b32.xlu0 %v423, 1
      %v445 = vpop.permute.xlu0 %444
      %446 = vrot.lane.b32.xlu0 %v397, 1
      %v447 = vpop.permute.xlu0 %446
      %448 = vrot.lane.b32.xlu0 %v426, 1
      %v449 = vpop.permute.xlu0 %448
      %450 = vrot.lane.b32.xlu0 %v400, 1
      %v451 = vpop.permute.xlu0 %450
      %452 = vrot.lane.b32.xlu0 %v429, 1
      %v453 = vpop.permute.xlu0 %452
      %454 = vrot.lane.b32.xlu0 %v403, 1
      %v455 = vpop.permute.xlu0 %454
      %456 = vrot.lane.b32.xlu0 %v432, 1
      %v457 = vpop.permute.xlu0 %456
      %vm458 = vcmask 7168
      %v459 = vsel %vm458, %v443, %v445
      %v460 = vsel %vm458, %v447, %v449
      %v461 = vsel %vm458, %v451, %v453
      %v462 = vsel %vm458, %v455, %v457
      %v471 = vsel %vm458, 0.0, %v443
      %v472 = vsel %vm458, 0.0, %v447
      %v473 = vsel %vm458, 0.0, %v451
      %v474 = vsel %vm458, 0.0, %v455
      %v476 = vperm.slane %v293, 0
      %v477 = vperm.slane %v293, 4
      %v480 = vperm.slane %v476, 0
      %v481 = vperm.slane %v477, 0
      %v482 = vmul.f32 %v471, %v480
      %v483 = vmul.f32 %v459, %v481
      %v484 = vmul.f32 %v472, %v480
      %v485 = vmul.f32 %v460, %v481
      %v486 = vmul.f32 %v473, %v480
      %v487 = vmul.f32 %v461, %v481
      %v488 = vmul.f32 %v474, %v480
      %v489 = vmul.f32 %v462, %v481
      %490 = vrot.lane.b32.xlu0 %v394, 127
      %v491 = vpop.permute.xlu0 %490
      %492 = vrot.lane.b32.xlu0 %v423, 127
      %v493 = vpop.permute.xlu0 %492
      %494 = vrot.lane.b32.xlu0 %v397, 127
      %v495 = vpop.permute.xlu0 %494
      %496 = vrot.lane.b32.xlu0 %v426, 127
      %v497 = vpop.permute.xlu0 %496
      %498 = vrot.lane.b32.xlu0 %v400, 127
      %v499 = vpop.permute.xlu0 %498
      %500 = vrot.lane.b32.xlu0 %v429, 127
      %v501 = vpop.permute.xlu0 %500
      %502 = vrot.lane.b32.xlu0 %v403, 127
      %v503 = vpop.permute.xlu0 %502
      %504 = vrot.lane.b32.xlu0 %v432, 127
      %v505 = vpop.permute.xlu0 %504
      %vm506 = vcmask 1039360
      %v507 = vsel %vm506, %v491, %v493
      %v508 = vsel %vm506, %v495, %v497
      %v509 = vsel %vm506, %v499, %v501
      %v510 = vsel %vm506, %v503, %v505
      %v519 = vsel %vm506, %v493, 0.0
      %v520 = vsel %vm506, %v497, 0.0
      %v521 = vsel %vm506, %v501, 0.0
      %v522 = vsel %vm506, %v505, 0.0
      %v523 = vperm.slane %v293, 2
      %v524 = vperm.slane %v293, 6
      %v527 = vperm.slane %v523, 2
      %v528 = vperm.slane %v524, 2
      %v529 = vmul.f32 %v507, %v527
      %v530 = vmul.f32 %v519, %v528
      %v531 = vmul.f32 %v508, %v527
      %v532 = vmul.f32 %v520, %v528
      %v533 = vmul.f32 %v509, %v527
      %v534 = vmul.f32 %v521, %v528
      %v535 = vmul.f32 %v510, %v527
      %v536 = vmul.f32 %v522, %v528
      %v538 = vsel %vm333, %v287, 0
      %v541 = vsel %vm333, %v288, 0
      %543 = vmatpush.msra.mxu0 0.0
      %544 = vmatpush.msra.mxu0 0.0
      %545 = vmatpush.msra.mxu0 0.0
      %546 = vmatpush.msra.mxu0 0.0
      %547 = vmatpush.msra.mxu0 %v535
      %548 = vmatpush.msra.mxu0 %v533
      %549 = vmatpush.msra.mxu0 %v531
      %550 = vmatpush.msra.mxu0 %v529
      %551 = vmatpush.msra.mxu0 %v403
      %552 = vmatpush.msra.mxu0 %v400
      %553 = vmatpush.msra.mxu0 %v397
      %554 = vmatpush.msra.mxu0 %v394
      %555 = vmatpush.msra.mxu0 %v488
      %556 = vmatpush.msra.mxu0 %v486
      %557 = vmatpush.msra.mxu0 %v484
      %558 = vmatpush.msra.mxu0 %v482
      %559 = vmatmul.f32.gmra.mxu0 %v538
      %v560 = vpop.f32.mrf.mxu0
      %v561 = vadd.f32 0.0, %v560
      %562 = vmatmul.f32.gmra.mxu0 %v541
      %v563 = vpop.f32.mrf.mxu0
      %v564 = vadd.f32 0.0, %v563
      %565 = vdwg.mxu0
      %566 = vmatpush.msra.mxu0 0.0
      %567 = vmatpush.msra.mxu0 0.0
      %568 = vmatpush.msra.mxu0 0.0
      %569 = vmatpush.msra.mxu0 0.0
      %570 = vmatpush.msra.mxu0 %v536
      %571 = vmatpush.msra.mxu0 %v534
      %572 = vmatpush.msra.mxu0 %v532
      %573 = vmatpush.msra.mxu0 %v530
      %574 = vmatpush.msra.mxu0 %v432
      %575 = vmatpush.msra.mxu0 %v429
      %576 = vmatpush.msra.mxu0 %v426
      %577 = vmatpush.msra.mxu0 %v423
      %578 = vmatpush.msra.mxu0 %v489
      %579 = vmatpush.msra.mxu0 %v487
      %580 = vmatpush.msra.mxu0 %v485
      %581 = vmatpush.msra.mxu0 %v483
      %582 = vmatmul.f32.gmra.mxu0 %v538
      %v583 = vpop.f32.mrf.mxu0
      %v584 = vadd.f32 0.0, %v583
      %585 = vmatmul.f32.gmra.mxu0 %v541
      %v586 = vpop.f32.mrf.mxu0
      %v587 = vadd.f32 0.0, %v586
      %588 = vdwg.mxu0
      %590 = vset.pattern.permute.xlu0 0
      %591 = vperm.xlu0 %590, %v289
      %v592 = vpop.permute.xlu0 %591
      %595 = vset.pattern.permute.xlu0 0
      %596 = vperm.xlu0 %595, %v290
      %v597 = vpop.permute.xlu0 %596
      %v599 = vmul.f32 %v561, %v592
      %v600 = vmul.f32 %v584, %v592
      %v601 = vmul.f32 %v564, %v597
      %v602 = vmul.f32 %v587, %v597
      %604 = vset.pattern.permute.xlu0 0
      %605 = vperm.xlu0 %604, %v291
      %v606 = vpop.permute.xlu0 %605
      %609 = vset.pattern.permute.xlu0 0
      %610 = vperm.xlu0 %609, %v292
      %v611 = vpop.permute.xlu0 %610
      %v613 = vadd.f32 %v599, %v606
      %v614 = vadd.f32 %v600, %v606
      %v615 = vadd.f32 %v601, %v611
      %v616 = vadd.f32 %v602, %v611
      %v617 = vmax.f32 %v613, 0.0
      %v618 = vmax.f32 %v614, 0.0
      %v619 = vmax.f32 %v615, 0.0
      %v620 = vmax.f32 %v616, 0.0
      %621 = vst [vmem:[%s278] sm:$0xff] %v617
      %622 = vst [vmem:[%s278 + $0x8] sm:$0xff] %v618
      %623 = vst [vmem:[%s278 + $0x10] sm:$0xff] %v619
      %624 = vst [vmem:[%s278 + $0x18] sm:$0xff] %v620
      %p625 = scmp.lt.s32.totalorder %s18, 1
      %s626 = scalar_select %p625, %s18, 1
      %s627 = smul.addr %s626, 4
      %s628 = smul.addr %s627, 8
      %s629 = scalar_lea.vmem %s7, %s628
      // Predicated region
      $region49: #{separable_conv2d.1} parent=47 // pred_check
        %p630 = pneg %p188
      $region50: #{separable_conv2d.1} parent=47 // pred_check_branch
        %632 = sbr.rel (%p630) target = $region52
      $region51: #{separable_conv2d.1} parent=47 // pred_region
        _
      $region52: #{separable_conv2d.1} parent=47 // pred_fallthru
        _
    $region48: #{separable_conv2d.1} parent=5 // pred_fallthru
      _
    %p633 = scmp.le.s32.totalorder 2, %s13
    // Predicated region
    $region53: #{separable_conv2d.1} parent=5 // pred_check
      %p634 = pneg %p633
    $region54: #{separable_conv2d.1} parent=5 // pred_check_branch
      %636 = sbr.rel (%p634) target = $region56
    $region55: #{separable_conv2d.1} parent=5 // pred_region
      %s637 = ssub.s32 %s13, 2
      // Predicated region
      $region57: #{separable_conv2d.1} parent=55 // pred_check
        %p638 = pneg %p194
      $region58: #{separable_conv2d.1} parent=55 // pred_check_branch
        %640 = sbr.rel (%p638) target = $region60
      $region59: #{separable_conv2d.1} parent=55 // pred_region
        %p641 = scmp.lt.s32.totalorder %s19, 1
        %s642 = scalar_select %p641, %s19, 1
        %s643 = smul.addr %s642, 4
        %s644 = smul.addr %s643, 8
        %s645 = scalar_lea.vmem %s7, %s644
      $region60: #{separable_conv2d.1} parent=55 // pred_fallthru
        _
    $region56: #{separable_conv2d.1} parent=5 // pred_fallthru
      _
  $region6: #{separable_conv2d.1} parent=0 // loop_footer
    %s17 = sadd.s32 1, %s13
  $region7: #{separable_conv2d.1} parent=0 // loop_footer_branch
    %12 = sbr.rel target = $region3
  $region8: #{separable_conv2d.1} parent=0 // loop_exit
    _

</llo_original>
